<compile_context>
chip_gen: v5e
topology: v5e:2x2
jax: 0.10.0
libtpu: 0.0.40
codegen_flags: <defaults>
</compile_context>

<pallas_src>
import jax
import jax.numpy as jnp
from jax.experimental import pallas as pl
from jax.experimental.pallas import tpu as pltpu


def _round_up(x, m):
    return pl.cdiv(x, m) * m


_HAS_BUFFERED = hasattr(pl, "Buffered")


# --------------------------------------------------------------------------
# Kernel: one (tm, tn) output tile = x_tile @ w_tile + bias_tile
# --------------------------------------------------------------------------
def _linear_kernel(x_ref, w_ref, b_ref, o_ref):
    acc = jnp.dot(x_ref[...], w_ref[...], preferred_element_type=jnp.float32)
    o_ref[...] = (acc + b_ref[...].astype(jnp.float32)).astype(o_ref.dtype)


# --------------------------------------------------------------------------
# Sizing helpers
# --------------------------------------------------------------------------
def _vmem_capacity_bytes():
    try:
        return int(pltpu.get_tpu_info().vmem_capacity_bytes)
    except Exception:
        return 64 << 20  # conservative (v7x per-TensorCore VMEM)


def _choose_tiles(M, K, n_pad, itemsize, vmem_budget, tm_cap):
    """Pick (tm, tn) tiles that fit the VMEM budget."""
    tn = min(n_pad, 512)

    if M >= 256:
        # Balanced, MXU-aligned (multiple of 128) M tiles.
        n_m_target = pl.cdiv(M, tm_cap)
        tm = min(_round_up(pl.cdiv(M, n_m_target), 128), tm_cap)
    else:
        tm = _round_up(M, 8)
    # Never overshoot M by more than a sublane group (keeps the single/last
    # tile's OOB region minimal).
    tm = min(tm, _round_up(M, 8))

    def need(tm_, tn_):
        # double-buffered x and out tiles; weight/bias conservatively counted
        # at 2 buffers even when single-buffering is available.
        return (2 * tm_ * K + 2 * K * tn_ + 2 * 8 * tn_ + 2 * tm_ * tn_) * itemsize

    while need(tm, tn) > vmem_budget:
        if tm > 128 and tm >= tn:
            tm = max(128, (tm // 2) // 128 * 128)
        elif tn > 128:
            tn = max(128, (tn // 2) // 128 * 128)
        else:
            # TODO(synk): K (F_in) tiling with a VMEM accumulator would be
            # needed here; request what we need and let the compiler cope.
            break
    return tm, tn, need(tm, tn)


# --------------------------------------------------------------------------
# pallas_call builder
# --------------------------------------------------------------------------
def _build_pallas_linear(M, K, n_pad, dtype, tm, tn, vmem_limit, single_buffer_params):
    grid = (pl.cdiv(n_pad, tn), pl.cdiv(M, tm))  # (N tiles outer, M tiles inner)

    if single_buffer_params:
        # Weight/bias blocks only change on the outer (N) axis; a single VMEM
        # buffer halves their resident footprint.
        w_spec = pl.BlockSpec((K, tn), lambda j, i: (0, j),
                              pipeline_mode=pl.Buffered(1))
        b_spec = pl.BlockSpec((1, tn), lambda j, i: (0, j),
                              pipeline_mode=pl.Buffered(1))
    else:
        w_spec = pl.BlockSpec((K, tn), lambda j, i: (0, j))
        b_spec = pl.BlockSpec((1, tn), lambda j, i: (0, j))

    itemsize = jnp.dtype(dtype).itemsize
    cost = pl.CostEstimate(
        flops=2 * M * K * n_pad,
        bytes_accessed=(M * K + K * n_pad + M * n_pad) * itemsize,
        transcendentals=0,
    )

    return pl.pallas_call(
        _linear_kernel,
        out_shape=jax.ShapeDtypeStruct((M, n_pad), dtype),
        grid_spec=pltpu.PrefetchScalarGridSpec(
            num_scalar_prefetch=0,
            grid=grid,
            in_specs=[
                pl.BlockSpec((tm, K), lambda j, i: (i, 0)),   # x: streams over inner M axis
                w_spec,                                       # weight tile (outer N axis only)
                b_spec,                                       # bias tile
            ],
            out_specs=pl.BlockSpec((tm, tn), lambda j, i: (i, j)),
        ),
        compiler_params=pltpu.CompilerParams(
            # Both axes write disjoint output tiles -> megacore shardable.
            # TODO(synk): on v7x confirm both TCs engage; else CORE_PARALLEL.
            dimension_semantics=("parallel", "parallel"),
            vmem_limit_bytes=int(vmem_limit),
        ),
        cost_estimate=cost,
    )


# --------------------------------------------------------------------------
# Forward wrappers
# --------------------------------------------------------------------------
def linear_forward(x2d, w_pad, b_pad, f_out, *, force_pallas=False):
    """x2d: (M, F_in); w_pad: (F_in, n_pad); b_pad: (1, n_pad). Returns (M, f_out)."""
    M, K = x2d.shape
    n_pad = w_pad.shape[1]
    dtype = x2d.dtype

    tiny = M < 256 and K <= 128 and n_pad <= 128
    if M < 8 or (tiny and not force_pallas):
        # Launch-overhead / lane-padding dominated: XLA's fused GEMM wins.
        y = jnp.dot(x2d, w_pad, preferred_element_type=jnp.float32)
        y = (y + b_pad[0].astype(jnp.float32)).astype(dtype)
        return y[:, :f_out] if f_out != n_pad else y

    itemsize = jnp.dtype(dtype).itemsize
    vmem_cap = _vmem_capacity_bytes()
    vmem_budget = max((vmem_cap * 3) // 4, 16 << 20)
    tm_cap = 1024 if vmem_cap > (64 << 20) else 512       # v5e/v6e vs v7x
    tm, tn, vmem_needed = _choose_tiles(M, K, n_pad, itemsize, vmem_budget, tm_cap)
    vmem_limit = min(max(vmem_needed + (4 << 20), 16 << 20), vmem_cap)

    if _HAS_BUFFERED:
        try:
            y = _build_pallas_linear(M, K, n_pad, dtype, tm, tn, vmem_limit, True)(
                x2d, w_pad, b_pad)
        except Exception:
            # pipeline_mode / Buffered(1) unsupported in this JAX build.
            y = _build_pallas_linear(M, K, n_pad, dtype, tm, tn, vmem_limit, False)(
                x2d, w_pad, b_pad)
    else:
        y = _build_pallas_linear(M, K, n_pad, dtype, tm, tn, vmem_limit, False)(
            x2d, w_pad, b_pad)

    return y[:, :f_out] if f_out != n_pad else y


def prepare_linear_params(weight, bias):
    """One-time parameter prep (PyTorch nn.Linear layout: weight (F_out, F_in)).

    Transposes to (F_in, F_out) and zero-pads F_out up to a multiple of 128 so
    the kernel's output stores are lane-dense.  Padded columns are zero and
    are sliced off after the matmul.
    """
    f_out, f_in = weight.shape
    n_pad = _round_up(f_out, 128)
    w_t = weight.T
    if n_pad != f_out:
        w_t = jnp.zeros((f_in, n_pad), weight.dtype).at[:, :f_out].set(w_t)
        b = jnp.zeros((n_pad,), bias.dtype).at[:f_out].set(bias)
    else:
        b = bias
    return w_t, b.reshape(1, n_pad), f_out


def make_time_distributed_linear(weight, bias):
    """Returns forward(x) reproducing TimeDistributed(nn.Linear(F_in, F_out))."""
    w_pad, b_pad, f_out = prepare_linear_params(weight, bias)

    def forward(x, *, force_pallas=False):
        if x.ndim <= 2:                                   # `len(x.size()) <= 2` branch
            x2d = x if x.ndim == 2 else x.reshape(1, -1)
            y = linear_forward(x2d, w_pad, b_pad, f_out, force_pallas=force_pallas)
            return y if x.ndim == 2 else y.reshape(-1)
        t, n = x.shape[0], x.shape[1]
        x2d = x.reshape(t * n, x.shape[2])                # contiguous().view(t*n, F_in)
        y = linear_forward(x2d, w_pad, b_pad, f_out, force_pallas=force_pallas)
        return y.reshape(t, n, f_out)                     # view(t, n, F_out)

    return forward


# --------------------------------------------------------------------------
# Demo / correctness check
# --------------------------------------------------------------------------
if __name__ == "__main__":
    key = jax.random.PRNGKey(0)
    T, N, F_IN, F_OUT = 8, 2, 32, 32

    kx, kw, kb = jax.random.split(key, 3)
    x = jax.random.normal(kx, (T, N, F_IN), dtype=jnp.float32)
    # PyTorch-style Linear parameters: weight (F_out, F_in), uniform init.
    bound = 1.0 / jnp.sqrt(F_IN)
    weight = jax.random.uniform(kw, (F_OUT, F_IN), jnp.float32, -bound, bound)
    bias = jax.random.uniform(kb, (F_OUT,), jnp.float32, -bound, bound)

    td_linear = make_time_distributed_linear(weight, bias)

    # Force the Pallas path so the kernel is exercised at these small demo
    # shapes (the auto heuristic would route them to the XLA fallback).
    y = jax.block_until_ready(td_linear(x, force_pallas=True))
    y_ref = (x.reshape(T * N, F_IN) @ weight.T + bias).reshape(T, N, F_OUT)
    assert y.shape == (T, N, F_OUT)
    assert jnp.allclose(y, y_ref, atol=1e-5, rtol=1e-5)

    # <=2-D branch of TimeDistributed.forward (small-problem fallback path).
    y2d = jax.block_until_ready(td_linear(x[0]))
    assert jnp.allclose(y2d, x[0] @ weight.T + bias, atol=1e-5, rtol=1e-5)

    # Larger (t, n) exercising M tiling with a ragged last M tile.
    x_big = jax.random.normal(kx, (65, 9, F_IN), dtype=jnp.float32)
    y_big = jax.block_until_ready(td_linear(x_big, force_pallas=True))
    y_big_ref = (x_big.reshape(65 * 9, F_IN) @ weight.T + bias).reshape(65, 9, F_OUT)
    assert jnp.allclose(y_big, y_big_ref, atol=1e-5, rtol=1e-5)

    print("KERNEL_OK")
</pallas_src>

<mosaic_0001>
module attributes {stable_mosaic.version = 11 : i64} {
  func.func @_linear_kernel(%arg0: i32, %arg1: i32, %arg2: memref<16x32xf32, #tpu.memory_space<vmem>>, %arg3: memref<32x128xf32, #tpu.memory_space<vmem>>, %arg4: memref<1x128xf32, #tpu.memory_space<vmem>>, %arg5: memref<16x128xf32, #tpu.memory_space<vmem>>) attributes {dimension_semantics = [#tpu.dimension_semantics<parallel>, #tpu.dimension_semantics<parallel>], iteration_bounds = array<i64: 1, 1>, scalar_prefetch = 0 : i64, scratch_operands = 0 : i64, tpu.core_type = #tpu.core_type<tc>, window_params = [{transform_indices = @transform_0, window_bounds = array<i64: 16, 32>}, {pipeline_mode = #tpu.pipeline_mode<synchronous>, transform_indices = @transform_1, window_bounds = array<i64: 32, 128>}, {pipeline_mode = #tpu.pipeline_mode<synchronous>, transform_indices = @transform_2, window_bounds = array<i64: 1, 128>}, {transform_indices = @transform_3, window_bounds = array<i64: 16, 128>}]} {
    %c0 = arith.constant 0 : index
    %c0_0 = arith.constant 0 : index
    %0 = vector.load %arg2[%c0, %c0_0] : memref<16x32xf32, #tpu.memory_space<vmem>>, vector<16x32xf32>
    %c0_1 = arith.constant 0 : index
    %c0_2 = arith.constant 0 : index
    %1 = vector.load %arg3[%c0_1, %c0_2] : memref<32x128xf32, #tpu.memory_space<vmem>>, vector<32x128xf32>
    %cst = arith.constant dense<0.000000e+00> : vector<16x128xf32>
    %2 = tpu.matmul %0, %1, %cst {dimension_numbers = #tpu.dot_dimension_numbers<[1], [0], [0], [1], [0, 0, 1, 1], [], []>} : vector<16x32xf32>, vector<32x128xf32>, vector<16x128xf32> -> vector<16x128xf32>
    %c0_3 = arith.constant 0 : index
    %c0_4 = arith.constant 0 : index
    %3 = vector.load %arg4[%c0_3, %c0_4] : memref<1x128xf32, #tpu.memory_space<vmem>>, vector<1x128xf32>
    %4 = vector.broadcast %3 : vector<1x128xf32> to vector<16x128xf32>
    %5 = arith.addf %2, %4 : vector<16x128xf32>
    %c0_5 = arith.constant 0 : index
    %c0_6 = arith.constant 0 : index
    %6 = vector.load %arg5[%c0_5, %c0_6] : memref<16x128xf32, #tpu.memory_space<vmem>>, vector<16x128xf32>
    tpu.vector_store %arg5[%c0_5, %c0_6], %5 {strides = array<i32>} : memref<16x128xf32, #tpu.memory_space<vmem>>, vector<16x128xf32>,
    return
  }
  func.func @transform_0(%arg0: i32, %arg1: i32) -> (i32, i32) {
    %c0_i32 = arith.constant 0 : i32
    %c0_i32_0 = arith.constant 0 : i32
    return %arg1, %c0_i32 : i32, i32
  }
  func.func @transform_1(%arg0: i32, %arg1: i32) -> (i32, i32) {
    %c0_i32 = arith.constant 0 : i32
    %c0_i32_0 = arith.constant 0 : i32
    return %c0_i32, %arg0 : i32, i32
  }
  func.func @transform_2(%arg0: i32, %arg1: i32) -> (i32, i32) {
    %c0_i32 = arith.constant 0 : i32
    %c0_i32_0 = arith.constant 0 : i32
    return %c0_i32, %arg0 : i32, i32
  }
  func.func @transform_3(%arg0: i32, %arg1: i32) -> (i32, i32) {
    %c0_i32 = arith.constant 0 : i32
    return %arg1, %arg0 : i32, i32
  }
}

module attributes {stable_mosaic.version = 11 : i64} {
  func.func @_linear_kernel(%arg0: i32, %arg1: i32, %arg2: memref<16x32xf32, #tpu.memory_space<vmem>>, %arg3: memref<32x128xf32, #tpu.memory_space<vmem>>, %arg4: memref<1x128xf32, #tpu.memory_space<vmem>>, %arg5: memref<16x128xf32, #tpu.memory_space<vmem>>) attributes {dimension_semantics = [#tpu.dimension_semantics<parallel>, #tpu.dimension_semantics<parallel>], iteration_bounds = array<i64: 1, 1>, scalar_prefetch = 0 : i64, scratch_operands = 0 : i64, tpu.core_type = #tpu.core_type<tc>, window_params = [{transform_indices = @transform_0, window_bounds = array<i64: 16, 32>}, {transform_indices = @transform_1, window_bounds = array<i64: 32, 128>}, {transform_indices = @transform_2, window_bounds = array<i64: 1, 128>}, {transform_indices = @transform_3, window_bounds = array<i64: 16, 128>}]} {
    %c0 = arith.constant 0 : index
    %c0_0 = arith.constant 0 : index
    %0 = vector.load %arg2[%c0, %c0_0] : memref<16x32xf32, #tpu.memory_space<vmem>>, vector<16x32xf32>
    %c0_1 = arith.constant 0 : index
    %c0_2 = arith.constant 0 : index
    %1 = vector.load %arg3[%c0_1, %c0_2] : memref<32x128xf32, #tpu.memory_space<vmem>>, vector<32x128xf32>
    %cst = arith.constant dense<0.000000e+00> : vector<16x128xf32>
    %2 = tpu.matmul %0, %1, %cst {dimension_numbers = #tpu.dot_dimension_numbers<[1], [0], [0], [1], [0, 0, 1, 1], [], []>} : vector<16x32xf32>, vector<32x128xf32>, vector<16x128xf32> -> vector<16x128xf32>
    %c0_3 = arith.constant 0 : index
    %c0_4 = arith.constant 0 : index
    %3 = vector.load %arg4[%c0_3, %c0_4] : memref<1x128xf32, #tpu.memory_space<vmem>>, vector<1x128xf32>
    %4 = vector.broadcast %3 : vector<1x128xf32> to vector<16x128xf32>
    %5 = arith.addf %2, %4 : vector<16x128xf32>
    %c0_5 = arith.constant 0 : index
    %c0_6 = arith.constant 0 : index
    %6 = vector.load %arg5[%c0_5, %c0_6] : memref<16x128xf32, #tpu.memory_space<vmem>>, vector<16x128xf32>
    tpu.vector_store %arg5[%c0_5, %c0_6], %5 {strides = array<i32>} : memref<16x128xf32, #tpu.memory_space<vmem>>, vector<16x128xf32>,
    return
  }
  func.func @transform_0(%arg0: i32, %arg1: i32) -> (i32, i32) {
    %c0_i32 = arith.constant 0 : i32
    %c0_i32_0 = arith.constant 0 : i32
    return %arg1, %c0_i32 : i32, i32
  }
  func.func @transform_1(%arg0: i32, %arg1: i32) -> (i32, i32) {
    %c0_i32 = arith.constant 0 : i32
    %c0_i32_0 = arith.constant 0 : i32
    return %c0_i32, %arg0 : i32, i32
  }
  func.func @transform_2(%arg0: i32, %arg1: i32) -> (i32, i32) {
    %c0_i32 = arith.constant 0 : i32
    %c0_i32_0 = arith.constant 0 : i32
    return %c0_i32, %arg0 : i32, i32
  }
  func.func @transform_3(%arg0: i32, %arg1: i32) -> (i32, i32) {
    %c0_i32 = arith.constant 0 : i32
    return %arg1, %arg0 : i32, i32
  }
}

</mosaic_0001>

<llo_original>
// kernel: tpu_custom_call.1
$region0: #{tpu_custom_call.1}
  #allocation0 [shape = 'u32[]', space=smem, size = 0x4, offset = 0x4, fixed_abs, tag = 'smem constant byte address 0x4 - core index']
  #allocation1 [shape = 'u32[72,128]{1,0:T(1,128)}', space=vmem, size = 0x9000, scoped, tag = 'internal scratch']
  %s0 = inlined_call_operand.hbm [shape: f32[16,32], index: 0, kind: input, shape index: {}]
  %s1 = inlined_call_operand.hbm [shape: f32[32,128], index: 1, kind: input, shape index: {}]
  %s2 = inlined_call_operand.vmem [shape: f32[1,128], index: 2, kind: input, shape index: {}]
  %s3 = inlined_call_operand.hbm [shape: f32[16,128], index: 3, kind: output, shape index: {}]
  %s4 = sld [smem:[#allocation0]]
  $region30: #{tpu_custom_call.1} parent=0
    _
  %s6 = ssub.s32 1, %s4
  %s7 = scalar_select 0, %s6, %s4
  $region1: #{tpu_custom_call.1} parent=0
    #allocation2 [shape = 'u8[8192]{0}', space=vmem, size = 0x2000, scoped, tag = 'input window, operand 0, single buffered']
    #allocation3 [shape = 's32[1]{0}', space=sflag, size = 0x4, scoped, tag = 'scoped memory for tpu_custom_call.1']
    #allocation4 [shape = 's32[1]{0}', space=sflag, size = 0x4, scoped, tag = 'scoped memory for tpu_custom_call.1']
    #allocation5 [shape = 'u8[16384]{0}', space=vmem, size = 0x4000, scoped, tag = 'input window, operand 1, single buffered']
    #allocation6 [shape = 's32[1]{0}', space=sflag, size = 0x4, scoped, tag = 'scoped memory for tpu_custom_call.1']
    #allocation7 [shape = 'u8[8192]{0}', space=vmem, size = 0x2000, scoped, tag = 'output window, operand 0, single buffered']
    %8 = vsyncpa [#allocation3], 0
    %9 = vsyncpa [#allocation6], 0
    %10 = vsyncpa [#allocation4], 0
    // Predicated region
    $region2: #{tpu_custom_call.1} parent=1 // pred_check
      _
    $region3: #{tpu_custom_call.1} parent=1 // pred_check_branch
      %12 = sbr.rel (0) target = $region5
    $region4: #{tpu_custom_call.1} parent=1 // pred_region
      %14 = vsyncadd [#allocation3], 0
      %s15 = sshll.u32 %s0, 4
      %s16 = int_to_ptr.hbm [resolvable:$true] %s15
      %s17 = sshll.u32 [#allocation2], 4
      %s18 = int_to_ptr.vmem [resolvable:$true] %s17
      %23 = dma.hbm_to_vmem [thread:$0]  %s16, 256, %s18, [#allocation3], 128, 128, 8
    $region5: #{tpu_custom_call.1} parent=1 // pred_fallthru
      _
    // Predicated region
    $region6: #{tpu_custom_call.1} parent=1 // pred_check
      _
    $region7: #{tpu_custom_call.1} parent=1 // pred_check_branch
      %25 = sbr.rel (0) target = $region9
    $region8: #{tpu_custom_call.1} parent=1 // pred_region
      %27 = vsyncadd [#allocation6], 0
      %s28 = sshll.u32 %s1, 4
      %s29 = int_to_ptr.hbm [resolvable:$true] %s28
      %s30 = sshll.u32 [#allocation5], 4
      %s31 = int_to_ptr.vmem [resolvable:$true] %s30
      %36 = dma.hbm_to_vmem [thread:$0]  %s29, 512, %s31, [#allocation6], 128, 128, 8
    $region9: #{tpu_custom_call.1} parent=1 // pred_fallthru
      _
    // Predicated region
    $region10: #{tpu_custom_call.1} parent=1 // pred_check
      _
    $region11: #{tpu_custom_call.1} parent=1 // pred_check_branch
      %38 = sbr.rel (0) target = $region13
    $region12: #{tpu_custom_call.1} parent=1 // pred_region
      _
    $region13: #{tpu_custom_call.1} parent=1 // pred_fallthru
      _
    // Predicated region
    $region14: #{tpu_custom_call.1} parent=1 // pred_check
      _
    $region15: #{tpu_custom_call.1} parent=1 // pred_check_branch
      %40 = sbr.rel (0) target = $region17
    $region16: #{tpu_custom_call.1} parent=1 // pred_region
      %42 = dma.done [#allocation3], 256
    $region17: #{tpu_custom_call.1} parent=1 // pred_fallthru
      _
    // Predicated region
    $region18: #{tpu_custom_call.1} parent=1 // pred_check
      _
    $region19: #{tpu_custom_call.1} parent=1 // pred_check_branch
      %44 = sbr.rel (0) target = $region21
    $region20: #{tpu_custom_call.1} parent=1 // pred_region
      %46 = dma.done [#allocation6], 512
    $region21: #{tpu_custom_call.1} parent=1 // pred_fallthru
      _
    %v47 = vld [vmem:[#allocation2] sm:$0xff]
    %v48 = vld [vmem:[#allocation2 + $0x8] sm:$0xff]
    %v49 = vld [vmem:[#allocation5] sm:$0xff]
    %v50 = vld [vmem:[#allocation5 + $0x8] sm:$0xff]
    %v51 = vld [vmem:[#allocation5 + $0x10] sm:$0xff]
    %v52 = vld [vmem:[#allocation5 + $0x18] sm:$0xff]
    %v53 = vld [vmem:[%s2] sm:$0x1]
    %v55 = vperm.slane %v53, 0
    %vm57 = vcmask 261120
    %v59 = vsel %vm57, %v47, 0
    %v62 = vsel %vm57, %v48, 0
    %64 = vmatpush.msra.mxu0 0.0
    %65 = vmatpush.msra.mxu0 0.0
    %66 = vmatpush.msra.mxu0 0.0
    %67 = vmatpush.msra.mxu0 0.0
    %68 = vmatpush.msra.mxu0 0.0
    %69 = vmatpush.msra.mxu0 0.0
    %70 = vmatpush.msra.mxu0 0.0
    %71 = vmatpush.msra.mxu0 0.0
    %72 = vmatpush.msra.mxu0 0.0
    %73 = vmatpush.msra.mxu0 0.0
    %74 = vmatpush.msra.mxu0 0.0
    %75 = vmatpush.msra.mxu0 0.0
    %76 = vmatpush.msra.mxu0 %v52
    %77 = vmatpush.msra.mxu0 %v51
    %78 = vmatpush.msra.mxu0 %v50
    %79 = vmatpush.msra.mxu0 %v49
    %80 = vmatmul.f32.gmra.mxu0 %v59
    %v81 = vpop.f32.mrf.mxu0
    %v82 = vadd.f32 %v55, %v81
    %83 = vmatmul.f32.gmra.mxu0 %v62
    %v84 = vpop.f32.mrf.mxu0
    %v85 = vadd.f32 %v55, %v84
    %86 = vdwg.mxu0
    %87 = vst [vmem:[#allocation7] sm:$0xff] %v82
    %88 = vst [vmem:[#allocation7 + $0x8] sm:$0xff] %v85
    // Predicated region
    $region22: #{tpu_custom_call.1} parent=1 // pred_check
      _
    $region23: #{tpu_custom_call.1} parent=1 // pred_check_branch
      %90 = sbr.rel (0) target = $region25
    $region24: #{tpu_custom_call.1} parent=1 // pred_region
      %92 = vsyncadd [#allocation4], 0
      %s93 = sshll.u32 [#allocation7], 4
      %s94 = int_to_ptr.vmem [resolvable:$true] %s93
      %s95 = sshll.u32 %s3, 4
      %s96 = int_to_ptr.hbm [resolvable:$true] %s95
      %101 = dma.vmem_to_hbm [thread:$0]  %s94, 256, %s96, [#allocation4], 128, 128, 8
    $region25: #{tpu_custom_call.1} parent=1 // pred_fallthru
      _
    // Predicated region
    $region26: #{tpu_custom_call.1} parent=1 // pred_check
      _
    $region27: #{tpu_custom_call.1} parent=1 // pred_check_branch
      %103 = sbr.rel (0) target = $region29
    $region28: #{tpu_custom_call.1} parent=1 // pred_region
      %105 = dma.done [#allocation4], 256
    $region29: #{tpu_custom_call.1} parent=1 // pred_fallthru
      _
    %106 = vsyncpa [#allocation3], 1
    %107 = vsyncpa [#allocation6], 1
    %108 = vsyncpa [#allocation4], 1

// kernel: tpu_custom_call.1
$region0: #{tpu_custom_call.1}
  #allocation0 [shape = 'u32[]', space=smem, size = 0x4, offset = 0x4, fixed_abs, tag = 'smem constant byte address 0x4 - core index']
  #allocation1 [shape = 'u32[72,128]{1,0:T(1,128)}', space=vmem, size = 0x9000, scoped, tag = 'internal scratch']
  %s0 = inlined_call_operand.hbm [shape: f32[16,32], index: 0, kind: input, shape index: {}]
  %s1 = inlined_call_operand.hbm [shape: f32[32,128], index: 1, kind: input, shape index: {}]
  %s2 = inlined_call_operand.vmem [shape: f32[1,128], index: 2, kind: input, shape index: {}]
  %s3 = inlined_call_operand.hbm [shape: f32[16,128], index: 3, kind: output, shape index: {}]
  %s4 = sld [smem:[#allocation0]]
  $region30: #{tpu_custom_call.1} parent=0
    _
  %s6 = ssub.s32 1, %s4
  %s7 = scalar_select 0, %s6, %s4
  $region1: #{tpu_custom_call.1} parent=0
    #allocation2 [shape = 'u8[8192]{0}', space=vmem, size = 0x2000, scoped, tag = 'input window, operand 0, single buffered']
    #allocation3 [shape = 's32[1]{0}', space=sflag, size = 0x4, scoped, tag = 'scoped memory for tpu_custom_call.1']
    #allocation4 [shape = 's32[1]{0}', space=sflag, size = 0x4, scoped, tag = 'scoped memory for tpu_custom_call.1']
    #allocation5 [shape = 'u8[16384]{0}', space=vmem, size = 0x4000, scoped, tag = 'input window, operand 1, single buffered']
    #allocation6 [shape = 's32[1]{0}', space=sflag, size = 0x4, scoped, tag = 'scoped memory for tpu_custom_call.1']
    #allocation7 [shape = 'u8[8192]{0}', space=vmem, size = 0x2000, scoped, tag = 'output window, operand 0, single buffered']
    %8 = vsyncpa [#allocation3], 0
    %9 = vsyncpa [#allocation6], 0
    %10 = vsyncpa [#allocation4], 0
    // Predicated region
    $region2: #{tpu_custom_call.1} parent=1 // pred_check
      _
    $region3: #{tpu_custom_call.1} parent=1 // pred_check_branch
      %12 = sbr.rel (0) target = $region5
    $region4: #{tpu_custom_call.1} parent=1 // pred_region
      %14 = vsyncadd [#allocation3], 0
      %s15 = sshll.u32 %s0, 4
      %s16 = int_to_ptr.hbm [resolvable:$true] %s15
      %s17 = sshll.u32 [#allocation2], 4
      %s18 = int_to_ptr.vmem [resolvable:$true] %s17
      %23 = dma.hbm_to_vmem [thread:$0]  %s16, 256, %s18, [#allocation3], 128, 128, 8
    $region5: #{tpu_custom_call.1} parent=1 // pred_fallthru
      _
    // Predicated region
    $region6: #{tpu_custom_call.1} parent=1 // pred_check
      _
    $region7: #{tpu_custom_call.1} parent=1 // pred_check_branch
      %25 = sbr.rel (0) target = $region9
    $region8: #{tpu_custom_call.1} parent=1 // pred_region
      %27 = vsyncadd [#allocation6], 0
      %s28 = sshll.u32 %s1, 4
      %s29 = int_to_ptr.hbm [resolvable:$true] %s28
      %s30 = sshll.u32 [#allocation5], 4
      %s31 = int_to_ptr.vmem [resolvable:$true] %s30
      %36 = dma.hbm_to_vmem [thread:$0]  %s29, 512, %s31, [#allocation6], 128, 128, 8
    $region9: #{tpu_custom_call.1} parent=1 // pred_fallthru
      _
    // Predicated region
    $region10: #{tpu_custom_call.1} parent=1 // pred_check
      _
    $region11: #{tpu_custom_call.1} parent=1 // pred_check_branch
      %38 = sbr.rel (0) target = $region13
    $region12: #{tpu_custom_call.1} parent=1 // pred_region
      _
    $region13: #{tpu_custom_call.1} parent=1 // pred_fallthru
      _
    // Predicated region
    $region14: #{tpu_custom_call.1} parent=1 // pred_check
      _
    $region15: #{tpu_custom_call.1} parent=1 // pred_check_branch
      %40 = sbr.rel (0) target = $region17
    $region16: #{tpu_custom_call.1} parent=1 // pred_region
      %42 = dma.done [#allocation3], 256
    $region17: #{tpu_custom_call.1} parent=1 // pred_fallthru
      _
    // Predicated region
    $region18: #{tpu_custom_call.1} parent=1 // pred_check
      _
    $region19: #{tpu_custom_call.1} parent=1 // pred_check_branch
      %44 = sbr.rel (0) target = $region21
    $region20: #{tpu_custom_call.1} parent=1 // pred_region
      %46 = dma.done [#allocation6], 512
    $region21: #{tpu_custom_call.1} parent=1 // pred_fallthru
      _
    %v47 = vld [vmem:[#allocation2] sm:$0xff]
    %v48 = vld [vmem:[#allocation2 + $0x8] sm:$0xff]
    %v49 = vld [vmem:[#allocation5] sm:$0xff]
    %v50 = vld [vmem:[#allocation5 + $0x8] sm:$0xff]
    %v51 = vld [vmem:[#allocation5 + $0x10] sm:$0xff]
    %v52 = vld [vmem:[#allocation5 + $0x18] sm:$0xff]
    %v53 = vld [vmem:[%s2] sm:$0x1]
    %v55 = vperm.slane %v53, 0
    %vm57 = vcmask 261120
    %v59 = vsel %vm57, %v47, 0
    %v62 = vsel %vm57, %v48, 0
    %64 = vmatpush.msra.mxu0 0.0
    %65 = vmatpush.msra.mxu0 0.0
    %66 = vmatpush.msra.mxu0 0.0
    %67 = vmatpush.msra.mxu0 0.0
    %68 = vmatpush.msra.mxu0 0.0
    %69 = vmatpush.msra.mxu0 0.0
    %70 = vmatpush.msra.mxu0 0.0
    %71 = vmatpush.msra.mxu0 0.0
    %72 = vmatpush.msra.mxu0 0.0
    %73 = vmatpush.msra.mxu0 0.0
    %74 = vmatpush.msra.mxu0 0.0
    %75 = vmatpush.msra.mxu0 0.0
    %76 = vmatpush.msra.mxu0 %v52
    %77 = vmatpush.msra.mxu0 %v51
    %78 = vmatpush.msra.mxu0 %v50
    %79 = vmatpush.msra.mxu0 %v49
    %80 = vmatmul.f32.gmra.mxu0 %v59
    %v81 = vpop.f32.mrf.mxu0
    %v82 = vadd.f32 %v55, %v81
    %83 = vmatmul.f32.gmra.mxu0 %v62
    %v84 = vpop.f32.mrf.mxu0
    %v85 = vadd.f32 %v55, %v84
    %86 = vdwg.mxu0
    %87 = vst [vmem:[#allocation7] sm:$0xff] %v82
    %88 = vst [vmem:[#allocation7 + $0x8] sm:$0xff] %v85
    // Predicated region
    $region22: #{tpu_custom_call.1} parent=1 // pred_check
      _
    $region23: #{tpu_custom_call.1} parent=1 // pred_check_branch
      %90 = sbr.rel (0) target = $region25
    $region24: #{tpu_custom_call.1} parent=1 // pred_region
      %92 = vsyncadd [#allocation4], 0
      %s93 = sshll.u32 [#allocation7], 4
      %s94 = int_to_ptr.vmem [resolvable:$true] %s93
      %s95 = sshll.u32 %s3, 4
      %s96 = int_to_ptr.hbm [resolvable:$true] %s95
      %101 = dma.vmem_to_hbm [thread:$0]  %s94, 256, %s96, [#allocation4], 128, 128, 8
    $region25: #{tpu_custom_call.1} parent=1 // pred_fallthru
      _
    // Predicated region
    $region26: #{tpu_custom_call.1} parent=1 // pred_check
      _
    $region27: #{tpu_custom_call.1} parent=1 // pred_check_branch
      %103 = sbr.rel (0) target = $region29
    $region28: #{tpu_custom_call.1} parent=1 // pred_region
      %105 = dma.done [#allocation4], 256
    $region29: #{tpu_custom_call.1} parent=1 // pred_fallthru
      _
    %106 = vsyncpa [#allocation3], 1
    %107 = vsyncpa [#allocation6], 1
    %108 = vsyncpa [#allocation4], 1

</llo_original>
